<compile_context>
chip_gen: v6e
topology: v6e:2x2x1
jax: 0.10.0
libtpu: 0.0.40
codegen_flags: <defaults>
</compile_context>

<pallas_src>
import math

import jax
import jax.numpy as jnp
from jax.experimental import pallas as pl
from jax.experimental.pallas import tpu as pltpu

_LANE = 128
_SUBLANE = 8


def _sinusoidal_kernel(x_ref, freq_ref, out_ref):
    # x_ref:    (tb, R)        f32  -- R consecutive positions per packed row
    # freq_ref: (1, half_dim)  f32  -- pinned frequency row
    # out_ref:  (tb, R*dim)          -- lane-dense packed output block
    f = freq_ref[...]                       # (1, half_dim)
    half_dim = f.shape[1]
    dim = 2 * half_dim
    r = x_ref.shape[1]
    # Unrolled at trace time; R is small (4 for dim=32, 1 for dim=128/256, ...).
    for p in range(r):
        x_p = x_ref[:, p : p + 1]           # (tb, 1) column for sub-position p
        arg = x_p * f                       # (tb, half_dim)  VPU broadcast multiply
        base = p * dim
        # Two static strip stores into the dense VMEM block.  The block itself
        # (and therefore the writeback DMA) is lane-dense; when half_dim % 128
        # == 0 these are fully aligned unmasked stores.
        out_ref[:, base : base + half_dim] = jnp.sin(arg).astype(out_ref.dtype)
        out_ref[:, base + half_dim : base + dim] = jnp.cos(arg).astype(out_ref.dtype)


def make_pos_embed_buffer(dim: int) -> jnp.ndarray:
    """Deterministic buffer identical to the PyTorch __init__."""
    assert dim % 2 == 0, "dim must be even (matches PyTorch module assumption)"
    half_dim = dim // 2
    assert half_dim > 1, "dim must be >= 4 to avoid divide-by-zero in the buffer"
    return jnp.exp(
        jnp.arange(half_dim, dtype=jnp.float32) * (-math.log(10000.0)) / (half_dim - 1)
    )


def sinusoidal_pos_emb(
    x: jnp.ndarray,
    pos_embed: jnp.ndarray,
    *,
    out_block_bytes: int = 4 << 20,
    out_dtype=jnp.float32,
) -> jnp.ndarray:
    """x: (B,) float -> (B, dim) embeddings.

    out_block_bytes: approximate VMEM budget for one output block (plus the
    lane-padded x block); double-buffered total stays < vmem_limit_bytes.
    out_dtype: output dtype (float32 by default; bf16 halves writeback traffic
    if the consumer tolerates it).
    """
    assert x.ndim == 1
    half_dim = pos_embed.shape[0]
    dim = 2 * half_dim
    b = x.shape[0]

    # Packing factor: R batch rows per packed lane row so the packed width W is
    # a multiple of 128 (R == 1 when dim is already a multiple of 128).
    r_pack = math.lcm(dim, _LANE) // dim
    w = r_pack * dim

    b_rows = -(-b // r_pack)          # packed rows
    b_pad = b_rows * r_pack           # <= b + (R-1); == b whenever b % R == 0

    x_f32 = x.astype(jnp.float32)
    if b_pad != b:
        # Tiny pad (< R elements).  Pad rows compute garbage-free sin(0)/cos(0)
        # and are sliced off below.
        x_f32 = jnp.pad(x_f32, (0, b_pad - b))
    x2d = x_f32.reshape(b_rows, r_pack)                 # free row-major view
    f2d = pos_embed.astype(jnp.float32).reshape(1, half_dim)

    # Row-block selection from a VMEM byte budget.
    # Per packed row in VMEM: W output lanes + the x row lane-padded to 128.
    row_bytes = (w + _LANE) * 4
    tb_budget = max(_SUBLANE, (out_block_bytes // row_bytes) // _SUBLANE * _SUBLANE)
    if b_rows <= _SUBLANE:
        tb = b_rows                                      # single block == full rows
    else:
        # Cap at ~half the rows (rounded to the sublane granule) so the parallel
        # grid axis always has >= 2 steps -> both v7x TensorCores get work.
        half_rows = ((-(-b_rows // 2)) + _SUBLANE - 1) // _SUBLANE * _SUBLANE
        tb = max(_SUBLANE, min(tb_budget, half_rows))
    grid = (pl.cdiv(b_rows, tb),)                        # ragged tail -> bounded block

    cost = pl.CostEstimate(
        flops=2 * b_pad * half_dim,
        transcendentals=b_pad * dim,
        bytes_accessed=4 * (b_pad * dim + b_pad + half_dim),
    )

    out = pl.pallas_call(
        _sinusoidal_kernel,
        out_shape=jax.ShapeDtypeStruct((b_rows, w), out_dtype),
        grid=grid,
        in_specs=[
            # Stream packed position rows (contiguous HBM read of the flat x).
            pl.BlockSpec((tb, r_pack), lambda i: (i, 0)),
            # Pin the frequency row: same block every step -> resident in VMEM.
            pl.BlockSpec((1, half_dim), lambda i: (0, 0)),
        ],
        # Lane-dense output block: dense VMEM tile + dense writeback DMA.
        out_specs=pl.BlockSpec((tb, w), lambda i: (i, 0)),
        compiler_params=pltpu.CompilerParams(
            # Independent row blocks: lets v7x shard them over its 2 TensorCores.
            dimension_semantics=("parallel",),
            # Double-buffered (out + x) blocks + elementwise temporaries fit in
            # 32 MiB on every generation (v5e/v6e: 128 MiB phys, v7x: 64 MiB phys).
            vmem_limit_bytes=32 << 20,
        ),
        cost_estimate=cost,
    )(x2d, f2d)

    # Free view back to (B_pad, dim): identical row-major layout to cat([sin,cos],-1).
    out = out.reshape(b_pad, dim)
    if b_pad != b:
        out = out[:b]
    return out


def _reference(x: jnp.ndarray, pos_embed: jnp.ndarray) -> jnp.ndarray:
    arg = x.astype(jnp.float32)[:, None] * pos_embed[None, :]
    return jnp.concatenate([jnp.sin(arg), jnp.cos(arg)], axis=-1)


if __name__ == "__main__":
    dim = 32          # embedding dim (even); small-dim use case from the review
    batch = 8

    key = jax.random.PRNGKey(0)
    k1, k2, k3, k4 = jax.random.split(key, 4)

    pos_embed = make_pos_embed_buffer(dim)

    # Primary small-shape run (diffusion timesteps: positive scalars).
    x = jax.random.uniform(k1, (batch,), jnp.float32, 0.0, 1000.0)
    out = jax.block_until_ready(sinusoidal_pos_emb(x, pos_embed))
    ref = _reference(x, pos_embed)
    assert out.shape == (batch, dim)
    assert jnp.allclose(out, ref, atol=1e-5, rtol=1e-5)

    # Multi-step grid + ragged (partial) last block, no batch padding (100 % 4 == 0).
    x2 = jax.random.uniform(k2, (100,), jnp.float32, 0.0, 1000.0)
    out2 = jax.block_until_ready(sinusoidal_pos_emb(x2, pos_embed))
    assert out2.shape == (100, dim)
    assert jnp.allclose(out2, _reference(x2, pos_embed), atol=1e-5, rtol=1e-5)

    # Batch not a multiple of the packing factor R=4 -> tiny pad + slice path.
    x3 = jax.random.uniform(k3, (10,), jnp.float32, 0.0, 1000.0)
    out3 = jax.block_until_ready(sinusoidal_pos_emb(x3, pos_embed))
    assert out3.shape == (10, dim)
    assert jnp.allclose(out3, _reference(x3, pos_embed), atol=1e-5, rtol=1e-5)

    # Larger dim (R=1): sin/cos halves are 128-aligned slabs, 2-step grid.
    dim2 = 256
    pe2 = make_pos_embed_buffer(dim2)
    x4 = jax.random.uniform(k4, (40,), jnp.float32, 0.0, 1000.0)
    out4 = jax.block_until_ready(sinusoidal_pos_emb(x4, pe2))
    assert out4.shape == (40, dim2)
    assert jnp.allclose(out4, _reference(x4, pe2), atol=1e-5, rtol=1e-5)

    print("KERNEL_OK")
</pallas_src>

<mosaic_0001>
module attributes {stable_mosaic.version = 11 : i64} {
  func.func @_sinusoidal_kernel(%arg0: i32, %arg1: memref<2x4xf32, #tpu.memory_space<vmem>>, %arg2: memref<1x16xf32, #tpu.memory_space<vmem>>, %arg3: memref<2x128xf32, #tpu.memory_space<vmem>>) attributes {dimension_semantics = [#tpu.dimension_semantics<parallel>], iteration_bounds = array<i64: 1>, scalar_prefetch = 0 : i64, scratch_operands = 0 : i64, tpu.core_type = #tpu.core_type<tc>, window_params = [{transform_indices = @transform_0, window_bounds = array<i64: 2, 4>}, {pipeline_mode = #tpu.pipeline_mode<synchronous>, transform_indices = @transform_1, window_bounds = array<i64: 1, 16>}, {transform_indices = @transform_2, window_bounds = array<i64: 2, 128>}]} {
    %c0 = arith.constant 0 : index
    %c0_0 = arith.constant 0 : index
    %0 = vector.load %arg2[%c0, %c0_0] : memref<1x16xf32, #tpu.memory_space<vmem>>, vector<1x16xf32>
    %c0_1 = arith.constant 0 : index
    %c0_2 = arith.constant 0 : index
    %1 = vector.load %arg1[%c0_1, %c0_2] : memref<2x4xf32, #tpu.memory_space<vmem>>, vector<2x1xf32>
    %2 = vector.broadcast %1 : vector<2x1xf32> to vector<2x16xf32>
    %3 = vector.broadcast %0 : vector<1x16xf32> to vector<2x16xf32>
    %4 = arith.mulf %2, %3 : vector<2x16xf32>
    %5 = math.sin %4 : vector<2x16xf32>
    %c0_3 = arith.constant 0 : index
    %c0_4 = arith.constant 0 : index
    %6 = vector.load %arg3[%c0_3, %c0_4] : memref<2x128xf32, #tpu.memory_space<vmem>>, vector<2x16xf32>
    tpu.vector_store %arg3[%c0_3, %c0_4], %5 {strides = array<i32>} : memref<2x128xf32, #tpu.memory_space<vmem>>, vector<2x16xf32>,
    %7 = math.cos %4 : vector<2x16xf32>
    %c0_5 = arith.constant 0 : index
    %c16 = arith.constant 16 : index
    %8 = vector.load %arg3[%c0_5, %c16] : memref<2x128xf32, #tpu.memory_space<vmem>>, vector<2x16xf32>
    tpu.vector_store %arg3[%c0_5, %c16], %7 {strides = array<i32>} : memref<2x128xf32, #tpu.memory_space<vmem>>, vector<2x16xf32>,
    %c0_6 = arith.constant 0 : index
    %c1 = arith.constant 1 : index
    %9 = vector.load %arg1[%c0_6, %c1] : memref<2x4xf32, #tpu.memory_space<vmem>>, vector<2x1xf32>
    %10 = vector.broadcast %9 : vector<2x1xf32> to vector<2x16xf32>
    %11 = vector.broadcast %0 : vector<1x16xf32> to vector<2x16xf32>
    %12 = arith.mulf %10, %11 : vector<2x16xf32>
    %13 = math.sin %12 : vector<2x16xf32>
    %c0_7 = arith.constant 0 : index
    %c32 = arith.constant 32 : index
    %14 = vector.load %arg3[%c0_7, %c32] : memref<2x128xf32, #tpu.memory_space<vmem>>, vector<2x16xf32>
    tpu.vector_store %arg3[%c0_7, %c32], %13 {strides = array<i32>} : memref<2x128xf32, #tpu.memory_space<vmem>>, vector<2x16xf32>,
    %15 = math.cos %12 : vector<2x16xf32>
    %c0_8 = arith.constant 0 : index
    %c48 = arith.constant 48 : index
    %16 = vector.load %arg3[%c0_8, %c48] : memref<2x128xf32, #tpu.memory_space<vmem>>, vector<2x16xf32>
    tpu.vector_store %arg3[%c0_8, %c48], %15 {strides = array<i32>} : memref<2x128xf32, #tpu.memory_space<vmem>>, vector<2x16xf32>,
    %c0_9 = arith.constant 0 : index
    %c2 = arith.constant 2 : index
    %17 = vector.load %arg1[%c0_9, %c2] : memref<2x4xf32, #tpu.memory_space<vmem>>, vector<2x1xf32>
    %18 = vector.broadcast %17 : vector<2x1xf32> to vector<2x16xf32>
    %19 = vector.broadcast %0 : vector<1x16xf32> to vector<2x16xf32>
    %20 = arith.mulf %18, %19 : vector<2x16xf32>
    %21 = math.sin %20 : vector<2x16xf32>
    %c0_10 = arith.constant 0 : index
    %c64 = arith.constant 64 : index
    %22 = vector.load %arg3[%c0_10, %c64] : memref<2x128xf32, #tpu.memory_space<vmem>>, vector<2x16xf32>
    tpu.vector_store %arg3[%c0_10, %c64], %21 {strides = array<i32>} : memref<2x128xf32, #tpu.memory_space<vmem>>, vector<2x16xf32>,
    %23 = math.cos %20 : vector<2x16xf32>
    %c0_11 = arith.constant 0 : index
    %c80 = arith.constant 80 : index
    %24 = vector.load %arg3[%c0_11, %c80] : memref<2x128xf32, #tpu.memory_space<vmem>>, vector<2x16xf32>
    tpu.vector_store %arg3[%c0_11, %c80], %23 {strides = array<i32>} : memref<2x128xf32, #tpu.memory_space<vmem>>, vector<2x16xf32>,
    %c0_12 = arith.constant 0 : index
    %c3 = arith.constant 3 : index
    %25 = vector.load %arg1[%c0_12, %c3] : memref<2x4xf32, #tpu.memory_space<vmem>>, vector<2x1xf32>
    %26 = vector.broadcast %25 : vector<2x1xf32> to vector<2x16xf32>
    %27 = vector.broadcast %0 : vector<1x16xf32> to vector<2x16xf32>
    %28 = arith.mulf %26, %27 : vector<2x16xf32>
    %29 = math.sin %28 : vector<2x16xf32>
    %c0_13 = arith.constant 0 : index
    %c96 = arith.constant 96 : index
    %30 = vector.load %arg3[%c0_13, %c96] : memref<2x128xf32, #tpu.memory_space<vmem>>, vector<2x16xf32>
    tpu.vector_store %arg3[%c0_13, %c96], %29 {strides = array<i32>} : memref<2x128xf32, #tpu.memory_space<vmem>>, vector<2x16xf32>,
    %31 = math.cos %28 : vector<2x16xf32>
    %c0_14 = arith.constant 0 : index
    %c112 = arith.constant 112 : index
    %32 = vector.load %arg3[%c0_14, %c112] : memref<2x128xf32, #tpu.memory_space<vmem>>, vector<2x16xf32>
    tpu.vector_store %arg3[%c0_14, %c112], %31 {strides = array<i32>} : memref<2x128xf32, #tpu.memory_space<vmem>>, vector<2x16xf32>,
    return
  }
  func.func @transform_0(%arg0: i32) -> (i32, i32) {
    %c0_i32 = arith.constant 0 : i32
    %c0_i32_0 = arith.constant 0 : i32
    return %arg0, %c0_i32 : i32, i32
  }
  func.func @transform_1(%arg0: i32) -> (i32, i32) {
    %c0_i32 = arith.constant 0 : i32
    %c0_i32_0 = arith.constant 0 : i32
    %c0_i32_1 = arith.constant 0 : i32
    return %c0_i32, %c0_i32_0 : i32, i32
  }
  func.func @transform_2(%arg0: i32) -> (i32, i32) {
    %c0_i32 = arith.constant 0 : i32
    %c0_i32_0 = arith.constant 0 : i32
    return %arg0, %c0_i32 : i32, i32
  }
}

</mosaic_0001>

<llo_original>
// kernel: tpu_custom_call.1
$region0: #{tpu_custom_call.1}
  #allocation0 [shape = 'u32[]', space=smem, size = 0x4, offset = 0x4, fixed_abs, tag = 'smem constant byte address 0x4 - core index']
  #allocation1 [shape = 'u32[144,128]{1,0:T(1,128)}', space=vmem, size = 0x12000, scoped, tag = 'internal scratch']
  %s0 = inlined_call_operand.hbm [shape: f32[2,4], index: 0, kind: input, shape index: {}]
  %s1 = inlined_call_operand.vmem [shape: f32[1,16], index: 1, kind: input, shape index: {}]
  %s2 = inlined_call_operand.hbm [shape: f32[2,128], index: 2, kind: output, shape index: {}]
  %s3 = sld [smem:[#allocation0]]
  $region22: #{tpu_custom_call.1} parent=0
    _
  %s5 = ssub.s32 1, %s3
  %s6 = scalar_select 0, %s5, %s3
  $region1: #{tpu_custom_call.1} parent=0
    #allocation2 [shape = 'u8[1024]{0}', space=vmem, size = 0x400, scoped, tag = 'input window, operand 0, single buffered']
    #allocation3 [shape = 's32[1]{0}', space=sflag, size = 0x4, scoped, tag = 'scoped memory for tpu_custom_call.1']
    #allocation4 [shape = 's32[1]{0}', space=sflag, size = 0x4, scoped, tag = 'scoped memory for tpu_custom_call.1']
    #allocation5 [shape = 'u8[1024]{0}', space=vmem, size = 0x400, scoped, tag = 'output window, operand 0, single buffered']
    %7 = vsyncpa [#allocation3], 0
    %8 = vsyncpa [#allocation4], 0
    // Predicated region
    $region2: #{tpu_custom_call.1} parent=1 // pred_check
      _
    $region3: #{tpu_custom_call.1} parent=1 // pred_check_branch
      %10 = sbr.rel (0) target = $region5
    $region4: #{tpu_custom_call.1} parent=1 // pred_region
      %s12 = ssub.s32 32, 32
      %13 = vsyncadd [#allocation3], %s12
      %s15 = sshll.u32 [#allocation2], 4
      %s16 = int_to_ptr.vmem [resolvable:$true] %s15
      %18 = dma.hbm_to_vmem [thread:$0]  %s0, 32, %s16, [#allocation3]
    $region5: #{tpu_custom_call.1} parent=1 // pred_fallthru
      _
    // Predicated region
    $region6: #{tpu_custom_call.1} parent=1 // pred_check
      _
    $region7: #{tpu_custom_call.1} parent=1 // pred_check_branch
      %20 = sbr.rel (0) target = $region9
    $region8: #{tpu_custom_call.1} parent=1 // pred_region
      _
    $region9: #{tpu_custom_call.1} parent=1 // pred_fallthru
      _
    // Predicated region
    $region10: #{tpu_custom_call.1} parent=1 // pred_check
      _
    $region11: #{tpu_custom_call.1} parent=1 // pred_check_branch
      %22 = sbr.rel (0) target = $region13
    $region12: #{tpu_custom_call.1} parent=1 // pred_region
      %23 = dma.done [#allocation3], 32
    $region13: #{tpu_custom_call.1} parent=1 // pred_fallthru
      _
    %v24 = vld [vmem:[%s1] sm:$0x1]
    %v25 = vld [vmem:[#allocation2] sm:$0x3]
    %27 = vset.pattern.permute.xlu0 0
    %28 = vperm.xlu0 %27, %v25
    %v29 = vpop.permute.xlu0 %28
    %v32 = vlaneseq
    %v33 = vshrl.u32 %v32, 7
    %v34 = vsub.s32 0, %v33
    %v35 = vrot.slane %v24, %v34
    %v37 = vmul.f32 %v29, %v35
    %v38 = vand.u32 2147483647, %v37
    %vm39 = vcmp.le.f32.partialorder %v38, 0.7853982
    %vm40 = vcmp.lt.s32.totalorder %v37, 0
    %v41 = vand.u32 %v37, 2139095040
    %v42 = vshrl.u32 %v41, 23
    %v43 = vsub.s32 %v42, 127
    %v44 = vand.u32 2147483647, %v37
    %v45 = vand.u32 %v44, 8388607
    %v46 = vor.u32 %v45, 8388608
    %v47 = vsub.s32 0, %v46
    %v48 = vadd.s32 %v43, 1
    %vm49 = vcmp.gt.s32.totalorder %v48, 0
    %v50 = vsel %vm49, %v48, 0
    %v51 = vshrl.u32 %v50, 5
    %v52 = vand.u32 %v50, 31
    %v53 = vsub.s32 32, %v52
    %v54 = vshrl.u32 683565275, %v53
    %v55 = vshll.u32 683565275, %v52
    %v56 = vshrl.u32 2475754826, %v53
    %v57 = vor.u32 %v55, %v56
    %v58 = vshll.u32 2475754826, %v52
    %v59 = vshrl.u32 2131351028, %v53
    %v60 = vor.u32 %v58, %v59
    %v61 = vshll.u32 2131351028, %v52
    %v62 = vshrl.u32 2102212464, %v53
    %v63 = vor.u32 %v61, %v62
    %v64 = vshll.u32 2102212464, %v52
    %v65 = vshrl.u32 920167782, %v53
    %v66 = vor.u32 %v64, %v65
    %v67 = vshll.u32 920167782, %v52
    %v68 = vshrl.u32 1326507024, %v53
    %v69 = vor.u32 %v67, %v68
    %vm70 = vcmp.lt.s32.totalorder %v51, 1
    %vm71 = vcmp.lt.s32.totalorder %v51, 2
    %vm72 = vcmp.lt.s32.totalorder %v51, 3
    %vm73 = vcmp.lt.s32.totalorder %v51, 4
    %v74 = vsel %vm70, %v54, %v57
    %v75 = vsel %vm73, %v63, 2102212464
    %v76 = vsel %vm72, %v60, %v75
    %v77 = vsel %vm71, %v74, %v76
    %v78 = vsel %vm70, %v57, %v60
    %v79 = vsel %vm73, %v66, 920167782
    %v80 = vsel %vm72, %v63, %v79
    %v81 = vsel %vm71, %v78, %v80
    %v82 = vsel %vm70, %v60, %v63
    %v83 = vsel %vm73, %v69, 1326507024
    %v84 = vsel %vm72, %v66, %v83
    %v85 = vsel %vm71, %v82, %v84
    %v86 = vshll.u32 %v46, 8
    %v87 = vmul.u32.u64.compose %v86, %v85
    %v88 = vextract.low.u32 %v87
    %v89 = vextract.high.u32 %v87
    %v90 = vmul.u32.u64.compose %v86, %v81
    %v91 = vextract.low.u32 %v90
    %v92 = vextract.high.u32 %v90
    %v93 = vmul.u32 %v86, %v77
    %v94 = vadd.s32 %v89, %v91
    %vm95 = vc.u32 %v89, %v91
    %v96 = vadd.s32 %v92, 1
    %v97 = vsel %vm95, %v96, %v92
    %v98 = vadd.s32 %v93, %v97
    %v99 = vadd.s32 %v98, 536870912
    %v100 = vshrl.u32 %v99, 30
    %v101 = vshll.u32 %v100, 30
    %v102 = vsub.s32 %v98, %v101
    %vm103 = vcmp.lt.s32.totalorder %v102, 0
    %v104 = vsub.s32 0, %v102
    %v105 = vsel %vm103, %v104, %v102
    %v106 = vclz %v105
    %v107 = vsub.s32 %v106, 2
    %vm108 = vcmp.gt.s32.totalorder 0, %v107
    %v109 = vsel %vm108, 0, %v107
    %v110 = vsub.s32 32, %v109
    %v111 = vshll.u32 %v102, %v109
    %v112 = vshrl.u32 %v94, %v110
    %v113 = vor.u32 %v111, %v112
    %v114 = vsub.s32 4294967266, %v109
    %v115 = vadd.s32 %v114, 127
    %v116 = vshll.u32 %v115, 23
    %v117 = vor.u32 4788187, %v116
    %v118 = vand.u32 2147483647, %v117
    %v120 = vcvt.s32.f32 %v113
    %v121 = vmul.f32 %v120, %v118
    %v122 = vxor.u32 %v121, 2147483648
    %v123 = vsel %vm40, %v122, %v121
    %v124 = vsub.s32 4, %v100
    %v125 = vsel %vm40, %v124, %v100
    %v126 = vsel %vm39, %v37, %v123
    %v127 = vsel %vm39, 0, %v125
    %v128 = vcosq.f32.pop %v126
    %v129 = vsinq.f32.pop %v126
    %vm130 = vweird.f32 %v37
    %v131 = vadd.s32 %v127, 3
    %v132 = vand.u32 %v131, 3
    %vm133 = vcmp.lt.s32.totalorder %v132, 2
    %vm134 = vcmp.eq.s32.totalorder %v132, 0
    %v135 = vxor.u32 %v129, 2147483648
    %v136 = vsel %vm134, %v128, %v135
    %vm137 = vcmp.eq.s32.totalorder %v132, 2
    %v138 = vxor.u32 %v128, 2147483648
    %v139 = vsel %vm137, %v138, %v129
    %v140 = vsel %vm133, %v136, %v139
    %v141 = vsel %vm130, nan, %v140
    %vm142 = vcmask 123904
    %143 = vst.msk [vmem:[#allocation5] sm:$0x3] %vm142, %v141
    %v144 = vand.u32 2147483647, %v37
    %vm145 = vcmp.le.f32.partialorder %v144, 0.7853982
    %vm146 = vcmp.lt.s32.totalorder %v37, 0
    %v147 = vand.u32 %v37, 2139095040
    %v148 = vshrl.u32 %v147, 23
    %v149 = vsub.s32 %v148, 127
    %v150 = vand.u32 2147483647, %v37
    %v151 = vand.u32 %v150, 8388607
    %v152 = vor.u32 %v151, 8388608
    %v153 = vsub.s32 0, %v152
    %v154 = vadd.s32 %v149, 1
    %vm155 = vcmp.gt.s32.totalorder %v154, 0
    %v156 = vsel %vm155, %v154, 0
    %v157 = vshrl.u32 %v156, 5
    %v158 = vand.u32 %v156, 31
    %v159 = vsub.s32 32, %v158
    %v160 = vshrl.u32 683565275, %v159
    %v161 = vshll.u32 683565275, %v158
    %v162 = vshrl.u32 2475754826, %v159
    %v163 = vor.u32 %v161, %v162
    %v164 = vshll.u32 2475754826, %v158
    %v165 = vshrl.u32 2131351028, %v159
    %v166 = vor.u32 %v164, %v165
    %v167 = vshll.u32 2131351028, %v158
    %v168 = vshrl.u32 2102212464, %v159
    %v169 = vor.u32 %v167, %v168
    %v170 = vshll.u32 2102212464, %v158
    %v171 = vshrl.u32 920167782, %v159
    %v172 = vor.u32 %v170, %v171
    %v173 = vshll.u32 920167782, %v158
    %v174 = vshrl.u32 1326507024, %v159
    %v175 = vor.u32 %v173, %v174
    %vm176 = vcmp.lt.s32.totalorder %v157, 1
    %vm177 = vcmp.lt.s32.totalorder %v157, 2
    %vm178 = vcmp.lt.s32.totalorder %v157, 3
    %vm179 = vcmp.lt.s32.totalorder %v157, 4
    %v180 = vsel %vm176, %v160, %v163
    %v181 = vsel %vm179, %v169, 2102212464
    %v182 = vsel %vm178, %v166, %v181
    %v183 = vsel %vm177, %v180, %v182
    %v184 = vsel %vm176, %v163, %v166
    %v185 = vsel %vm179, %v172, 920167782
    %v186 = vsel %vm178, %v169, %v185
    %v187 = vsel %vm177, %v184, %v186
    %v188 = vsel %vm176, %v166, %v169
    %v189 = vsel %vm179, %v175, 1326507024
    %v190 = vsel %vm178, %v172, %v189
    %v191 = vsel %vm177, %v188, %v190
    %v192 = vshll.u32 %v152, 8
    %v193 = vmul.u32.u64.compose %v192, %v191
    %v194 = vextract.low.u32 %v193
    %v195 = vextract.high.u32 %v193
    %v196 = vmul.u32.u64.compose %v192, %v187
    %v197 = vextract.low.u32 %v196
    %v198 = vextract.high.u32 %v196
    %v199 = vmul.u32 %v192, %v183
    %v200 = vadd.s32 %v195, %v197
    %vm201 = vc.u32 %v195, %v197
    %v202 = vadd.s32 %v198, 1
    %v203 = vsel %vm201, %v202, %v198
    %v204 = vadd.s32 %v199, %v203
    %v205 = vadd.s32 %v204, 536870912
    %v206 = vshrl.u32 %v205, 30
    %v207 = vshll.u32 %v206, 30
    %v208 = vsub.s32 %v204, %v207
    %vm209 = vcmp.lt.s32.totalorder %v208, 0
    %v210 = vsub.s32 0, %v208
    %v211 = vsel %vm209, %v210, %v208
    %v212 = vclz %v211
    %v213 = vsub.s32 %v212, 2
    %vm214 = vcmp.gt.s32.totalorder 0, %v213
    %v215 = vsel %vm214, 0, %v213
    %v216 = vsub.s32 32, %v215
    %v217 = vshll.u32 %v208, %v215
    %v218 = vshrl.u32 %v200, %v216
    %v219 = vor.u32 %v217, %v218
    %v220 = vsub.s32 4294967266, %v215
    %v221 = vadd.s32 %v220, 127
    %v222 = vshll.u32 %v221, 23
    %v223 = vor.u32 4788187, %v222
    %v224 = vand.u32 2147483647, %v223
    %v226 = vcvt.s32.f32 %v219
    %v227 = vmul.f32 %v226, %v224
    %v228 = vxor.u32 %v227, 2147483648
    %v229 = vsel %vm146, %v228, %v227
    %v230 = vsub.s32 4, %v206
    %v231 = vsel %vm146, %v230, %v206
    %v232 = vsel %vm145, %v37, %v229
    %v233 = vsel %vm145, 0, %v231
    %v234 = vcosq.f32.pop %v232
    %v235 = vsinq.f32.pop %v232
    %vm236 = vweird.f32 %v37
    %v237 = vand.u32 %v233, 3
    %vm238 = vcmp.lt.s32.totalorder %v237, 2
    %vm239 = vcmp.eq.s32.totalorder %v237, 0
    %v240 = vxor.u32 %v235, 2147483648
    %v241 = vsel %vm239, %v234, %v240
    %vm242 = vcmp.eq.s32.totalorder %v237, 2
    %v243 = vxor.u32 %v234, 2147483648
    %v244 = vsel %vm242, %v243, %v235
    %v245 = vsel %vm238, %v241, %v244
    %v246 = vsel %vm236, nan, %v245
    %248 = vrot.lane.b32.xlu0 %v246, 16
    %v249 = vpop.permute.xlu0 %248
    %vm251 = vcmask 255104
    %252 = vst.msk [vmem:[#allocation5] sm:$0x3] %vm251, %v249
    %v253 = vld [vmem:[#allocation2] sm:$0x3]
    %255 = vset.pattern.permute.xlu0 1
    %256 = vperm.xlu0 %255, %v253
    %v257 = vpop.permute.xlu0 %256
    %v259 = vmul.f32 %v257, %v35
    %v260 = vand.u32 2147483647, %v259
    %vm261 = vcmp.le.f32.partialorder %v260, 0.7853982
    %vm262 = vcmp.lt.s32.totalorder %v259, 0
    %v263 = vand.u32 %v259, 2139095040
    %v264 = vshrl.u32 %v263, 23
    %v265 = vsub.s32 %v264, 127
    %v266 = vand.u32 2147483647, %v259
    %v267 = vand.u32 %v266, 8388607
    %v268 = vor.u32 %v267, 8388608
    %v269 = vsub.s32 0, %v268
    %v270 = vadd.s32 %v265, 1
    %vm271 = vcmp.gt.s32.totalorder %v270, 0
    %v272 = vsel %vm271, %v270, 0
    %v273 = vshrl.u32 %v272, 5
    %v274 = vand.u32 %v272, 31
    %v275 = vsub.s32 32, %v274
    %v276 = vshrl.u32 683565275, %v275
    %v277 = vshll.u32 683565275, %v274
    %v278 = vshrl.u32 2475754826, %v275
    %v279 = vor.u32 %v277, %v278
    %v280 = vshll.u32 2475754826, %v274
    %v281 = vshrl.u32 2131351028, %v275
    %v282 = vor.u32 %v280, %v281
    %v283 = vshll.u32 2131351028, %v274
    %v284 = vshrl.u32 2102212464, %v275
    %v285 = vor.u32 %v283, %v284
    %v286 = vshll.u32 2102212464, %v274
    %v287 = vshrl.u32 920167782, %v275
    %v288 = vor.u32 %v286, %v287
    %v289 = vshll.u32 920167782, %v274
    %v290 = vshrl.u32 1326507024, %v275
    %v291 = vor.u32 %v289, %v290
    %vm292 = vcmp.lt.s32.totalorder %v273, 1
    %vm293 = vcmp.lt.s32.totalorder %v273, 2
    %vm294 = vcmp.lt.s32.totalorder %v273, 3
    %vm295 = vcmp.lt.s32.totalorder %v273, 4
    %v296 = vsel %vm292, %v276, %v279
    %v297 = vsel %vm295, %v285, 2102212464
    %v298 = vsel %vm294, %v282, %v297
    %v299 = vsel %vm293, %v296, %v298
    %v300 = vsel %vm292, %v279, %v282
    %v301 = vsel %vm295, %v288, 920167782
    %v302 = vsel %vm294, %v285, %v301
    %v303 = vsel %vm293, %v300, %v302
    %v304 = vsel %vm292, %v282, %v285
    %v305 = vsel %vm295, %v291, 1326507024
    %v306 = vsel %vm294, %v288, %v305
    %v307 = vsel %vm293, %v304, %v306
    %v308 = vshll.u32 %v268, 8
    %v309 = vmul.u32.u64.compose %v308, %v307
    %v310 = vextract.low.u32 %v309
    %v311 = vextract.high.u32 %v309
    %v312 = vmul.u32.u64.compose %v308, %v303
    %v313 = vextract.low.u32 %v312
    %v314 = vextract.high.u32 %v312
    %v315 = vmul.u32 %v308, %v299
    %v316 = vadd.s32 %v311, %v313
    %vm317 = vc.u32 %v311, %v313
    %v318 = vadd.s32 %v314, 1
    %v319 = vsel %vm317, %v318, %v314
    %v320 = vadd.s32 %v315, %v319
    %v321 = vadd.s32 %v320, 536870912
    %v322 = vshrl.u32 %v321, 30
    %v323 = vshll.u32 %v322, 30
    %v324 = vsub.s32 %v320, %v323
    %vm325 = vcmp.lt.s32.totalorder %v324, 0
    %v326 = vsub.s32 0, %v324
    %v327 = vsel %vm325, %v326, %v324
    %v328 = vclz %v327
    %v329 = vsub.s32 %v328, 2
    %vm330 = vcmp.gt.s32.totalorder 0, %v329
    %v331 = vsel %vm330, 0, %v329
    %v332 = vsub.s32 32, %v331
    %v333 = vshll.u32 %v324, %v331
    %v334 = vshrl.u32 %v316, %v332
    %v335 = vor.u32 %v333, %v334
    %v336 = vsub.s32 4294967266, %v331
    %v337 = vadd.s32 %v336, 127
    %v338 = vshll.u32 %v337, 23
    %v339 = vor.u32 4788187, %v338
    %v340 = vand.u32 2147483647, %v339
    %v342 = vcvt.s32.f32 %v335
    %v343 = vmul.f32 %v342, %v340
    %v344 = vxor.u32 %v343, 2147483648
    %v345 = vsel %vm262, %v344, %v343
    %v346 = vsub.s32 4, %v322
    %v347 = vsel %vm262, %v346, %v322
    %v348 = vsel %vm261, %v259, %v345
    %v349 = vsel %vm261, 0, %v347
    %v350 = vcosq.f32.pop %v348
    %v351 = vsinq.f32.pop %v348
    %vm352 = vweird.f32 %v259
    %v353 = vadd.s32 %v349, 3
    %v354 = vand.u32 %v353, 3
    %vm355 = vcmp.lt.s32.totalorder %v354, 2
    %vm356 = vcmp.eq.s32.totalorder %v354, 0
    %v357 = vxor.u32 %v351, 2147483648
    %v358 = vsel %vm356, %v350, %v357
    %vm359 = vcmp.eq.s32.totalorder %v354, 2
    %v360 = vxor.u32 %v350, 2147483648
    %v361 = vsel %vm359, %v360, %v351
    %v362 = vsel %vm355, %v358, %v361
    %v363 = vsel %vm352, nan, %v362
    %365 = vrot.lane.b32.xlu0 %v363, 32
    %v366 = vpop.permute.xlu0 %365
    %vm368 = vcmask 386304
    %369 = vst.msk [vmem:[#allocation5] sm:$0x3] %vm368, %v366
    %v370 = vand.u32 2147483647, %v259
    %vm371 = vcmp.le.f32.partialorder %v370, 0.7853982
    %vm372 = vcmp.lt.s32.totalorder %v259, 0
    %v373 = vand.u32 %v259, 2139095040
    %v374 = vshrl.u32 %v373, 23
    %v375 = vsub.s32 %v374, 127
    %v376 = vand.u32 2147483647, %v259
    %v377 = vand.u32 %v376, 8388607
    %v378 = vor.u32 %v377, 8388608
    %v379 = vsub.s32 0, %v378
    %v380 = vadd.s32 %v375, 1
    %vm381 = vcmp.gt.s32.totalorder %v380, 0
    %v382 = vsel %vm381, %v380, 0
    %v383 = vshrl.u32 %v382, 5
    %v384 = vand.u32 %v382, 31
    %v385 = vsub.s32 32, %v384
    %v386 = vshrl.u32 683565275, %v385
    %v387 = vshll.u32 683565275, %v384
    %v388 = vshrl.u32 2475754826, %v385
    %v389 = vor.u32 %v387, %v388
    %v390 = vshll.u32 2475754826, %v384
    %v391 = vshrl.u32 2131351028, %v385
    %v392 = vor.u32 %v390, %v391
    %v393 = vshll.u32 2131351028, %v384
    %v394 = vshrl.u32 2102212464, %v385
    %v395 = vor.u32 %v393, %v394
    %v396 = vshll.u32 2102212464, %v384
    %v397 = vshrl.u32 920167782, %v385
    %v398 = vor.u32 %v396, %v397
    %v399 = vshll.u32 920167782, %v384
    %v400 = vshrl.u32 1326507024, %v385
    %v401 = vor.u32 %v399, %v400
    %vm402 = vcmp.lt.s32.totalorder %v383, 1
    %vm403 = vcmp.lt.s32.totalorder %v383, 2
    %vm404 = vcmp.lt.s32.totalorder %v383, 3
    %vm405 = vcmp.lt.s32.totalorder %v383, 4
    %v406 = vsel %vm402, %v386, %v389
    %v407 = vsel %vm405, %v395, 2102212464
    %v408 = vsel %vm404, %v392, %v407
    %v409 = vsel %vm403, %v406, %v408
    %v410 = vsel %vm402, %v389, %v392
    %v411 = vsel %vm405, %v398, 920167782
    %v412 = vsel %vm404, %v395, %v411
    %v413 = vsel %vm403, %v410, %v412
    %v414 = vsel %vm402, %v392, %v395
    %v415 = vsel %vm405, %v401, 1326507024
    %v416 = vsel %vm404, %v398, %v415
    %v417 = vsel %vm403, %v414, %v416
    %v418 = vshll.u32 %v378, 8
    %v419 = vmul.u32.u64.compose %v418, %v417
    %v420 = vextract.low.u32 %v419
    %v421 = vextract.high.u32 %v419
    %v422 = vmul.u32.u64.compose %v418, %v413
    %v423 = vextract.low.u32 %v422
    %v424 = vextract.high.u32 %v422
    %v425 = vmul.u32 %v418, %v409
    %v426 = vadd.s32 %v421, %v423
    %vm427 = vc.u32 %v421, %v423
    %v428 = vadd.s32 %v424, 1
    %v429 = vsel %vm427, %v428, %v424
    %v430 = vadd.s32 %v425, %v429
    %v431 = vadd.s32 %v430, 536870912
    %v432 = vshrl.u32 %v431, 30
    %v433 = vshll.u32 %v432, 30
    %v434 = vsub.s32 %v430, %v433
    %vm435 = vcmp.lt.s32.totalorder %v434, 0
    %v436 = vsub.s32 0, %v434
    %v437 = vsel %vm435, %v436, %v434
    %v438 = vclz %v437
    %v439 = vsub.s32 %v438, 2
    %vm440 = vcmp.gt.s32.totalorder 0, %v439
    %v441 = vsel %vm440, 0, %v439
    %v442 = vsub.s32 32, %v441
    %v443 = vshll.u32 %v434, %v441
    %v444 = vshrl.u32 %v426, %v442
    %v445 = vor.u32 %v443, %v444
    %v446 = vsub.s32 4294967266, %v441
    %v447 = vadd.s32 %v446, 127
    %v448 = vshll.u32 %v447, 23
    %v449 = vor.u32 4788187, %v448
    %v450 = vand.u32 2147483647, %v449
    %v452 = vcvt.s32.f32 %v445
    %v453 = vmul.f32 %v452, %v450
    %v454 = vxor.u32 %v453, 2147483648
    %v455 = vsel %vm372, %v454, %v453
    %v456 = vsub.s32 4, %v432
    %v457 = vsel %vm372, %v456, %v432
    %v458 = vsel %vm371, %v259, %v455
    %v459 = vsel %vm371, 0, %v457
    %v460 = vcosq.f32.pop %v458
    %v461 = vsinq.f32.pop %v458
    %vm462 = vweird.f32 %v259
    %v463 = vand.u32 %v459, 3
    %vm464 = vcmp.lt.s32.totalorder %v463, 2
    %vm465 = vcmp.eq.s32.totalorder %v463, 0
    %v466 = vxor.u32 %v461, 2147483648
    %v467 = vsel %vm465, %v460, %v466
    %vm468 = vcmp.eq.s32.totalorder %v463, 2
    %v469 = vxor.u32 %v460, 2147483648
    %v470 = vsel %vm468, %v469, %v461
    %v471 = vsel %vm464, %v467, %v470
    %v472 = vsel %vm462, nan, %v471
    %474 = vrot.lane.b32.xlu0 %v472, 48
    %v475 = vpop.permute.xlu0 %474
    %vm477 = vcmask 517504
    %478 = vst.msk [vmem:[#allocation5] sm:$0x3] %vm477, %v475
    %v479 = vld [vmem:[#allocation2] sm:$0x3]
    %481 = vset.pattern.permute.xlu0 2
    %482 = vperm.xlu0 %481, %v479
    %v483 = vpop.permute.xlu0 %482
    %v485 = vmul.f32 %v483, %v35
    %v486 = vand.u32 2147483647, %v485
    %vm487 = vcmp.le.f32.partialorder %v486, 0.7853982
    %vm488 = vcmp.lt.s32.totalorder %v485, 0
    %v489 = vand.u32 %v485, 2139095040
    %v490 = vshrl.u32 %v489, 23
    %v491 = vsub.s32 %v490, 127
    %v492 = vand.u32 2147483647, %v485
    %v493 = vand.u32 %v492, 8388607
    %v494 = vor.u32 %v493, 8388608
    %v495 = vsub.s32 0, %v494
    %v496 = vadd.s32 %v491, 1
    %vm497 = vcmp.gt.s32.totalorder %v496, 0
    %v498 = vsel %vm497, %v496, 0
    %v499 = vshrl.u32 %v498, 5
    %v500 = vand.u32 %v498, 31
    %v501 = vsub.s32 32, %v500
    %v502 = vshrl.u32 683565275, %v501
    %v503 = vshll.u32 683565275, %v500
    %v504 = vshrl.u32 2475754826, %v501
    %v505 = vor.u32 %v503, %v504
    %v506 = vshll.u32 2475754826, %v500
    %v507 = vshrl.u32 2131351028, %v501
    %v508 = vor.u32 %v506, %v507
    %v509 = vshll.u32 2131351028, %v500
    %v510 = vshrl.u32 2102212464, %v501
    %v511 = vor.u32 %v509, %v510
    %v512 = vshll.u32 2102212464, %v500
    %v513 = vshrl.u32 920167782, %v501
    %v514 = vor.u32 %v512, %v513
    %v515 = vshll.u32 920167782, %v500
    %v516 = vshrl.u32 1326507024, %v501
    %v517 = vor.u32 %v515, %v516
    %vm518 = vcmp.lt.s32.totalorder %v499, 1
    %vm519 = vcmp.lt.s32.totalorder %v499, 2
    %vm520 = vcmp.lt.s32.totalorder %v499, 3
    %vm521 = vcmp.lt.s32.totalorder %v499, 4
    %v522 = vsel %vm518, %v502, %v505
    %v523 = vsel %vm521, %v511, 2102212464
    %v524 = vsel %vm520, %v508, %v523
    %v525 = vsel %vm519, %v522, %v524
    %v526 = vsel %vm518, %v505, %v508
    %v527 = vsel %vm521, %v514, 920167782
    %v528 = vsel %vm520, %v511, %v527
    %v529 = vsel %vm519, %v526, %v528
    %v530 = vsel %vm518, %v508, %v511
    %v531 = vsel %vm521, %v517, 1326507024
    %v532 = vsel %vm520, %v514, %v531
    %v533 = vsel %vm519, %v530, %v532
    %v534 = vshll.u32 %v494, 8
    %v535 = vmul.u32.u64.compose %v534, %v533
    %v536 = vextract.low.u32 %v535
    %v537 = vextract.high.u32 %v535
    %v538 = vmul.u32.u64.compose %v534, %v529
    %v539 = vextract.low.u32 %v538
    %v540 = vextract.high.u32 %v538
    %v541 = vmul.u32 %v534, %v525
    %v542 = vadd.s32 %v537, %v539
    %vm543 = vc.u32 %v537, %v539
    %v544 = vadd.s32 %v540, 1
    %v545 = vsel %vm543, %v544, %v540
    %v546 = vadd.s32 %v541, %v545
    %v547 = vadd.s32 %v546, 536870912
    %v548 = vshrl.u32 %v547, 30
    %v549 = vshll.u32 %v548, 30
    %v550 = vsub.s32 %v546, %v549
    %vm551 = vcmp.lt.s32.totalorder %v550, 0
    %v552 = vsub.s32 0, %v550
    %v553 = vsel %vm551, %v552, %v550
    %v554 = vclz %v553
    %v555 = vsub.s32 %v554, 2
    %vm556 = vcmp.gt.s32.totalorder 0, %v555
    %v557 = vsel %vm556, 0, %v555
    %v558 = vsub.s32 32, %v557
    %v559 = vshll.u32 %v550, %v557
    %v560 = vshrl.u32 %v542, %v558
    %v561 = vor.u32 %v559, %v560
    %v562 = vsub.s32 4294967266, %v557
    %v563 = vadd.s32 %v562, 127
    %v564 = vshll.u32 %v563, 23
    %v565 = vor.u32 4788187, %v564
    %v566 = vand.u32 2147483647, %v565
    %v568 = vcvt.s32.f32 %v561
    %v569 = vmul.f32 %v568, %v566
    %v570 = vxor.u32 %v569, 2147483648
    %v571 = vsel %vm488, %v570, %v569
    %v572 = vsub.s32 4, %v548
    %v573 = vsel %vm488, %v572, %v548
    %v574 = vsel %vm487, %v485, %v571
    %v575 = vsel %vm487, 0, %v573
    %v576 = vcosq.f32.pop %v574
    %v577 = vsinq.f32.pop %v574
    %vm578 = vweird.f32 %v485
    %v579 = vadd.s32 %v575, 3
    %v580 = vand.u32 %v579, 3
    %vm581 = vcmp.lt.s32.totalorder %v580, 2
    %vm582 = vcmp.eq.s32.totalorder %v580, 0
    %v583 = vxor.u32 %v577, 2147483648
    %v584 = vsel %vm582, %v576, %v583
    %vm585 = vcmp.eq.s32.totalorder %v580, 2
    %v586 = vxor.u32 %v576, 2147483648
    %v587 = vsel %vm585, %v586, %v577
    %v588 = vsel %vm581, %v584, %v587
    %v589 = vsel %vm578, nan, %v588
    %591 = vrot.lane.b32.xlu0 %v589, 64
    %v592 = vpop.permute.xlu0 %591
    %vm594 = vcmask 648704
    %595 = vst.msk [vmem:[#allocation5] sm:$0x3] %vm594, %v592
    %v596 = vand.u32 2147483647, %v485
    %vm597 = vcmp.le.f32.partialorder %v596, 0.7853982
    %vm598 = vcmp.lt.s32.totalorder %v485, 0
    %v599 = vand.u32 %v485, 2139095040
    %v600 = vshrl.u32 %v599, 23
    %v601 = vsub.s32 %v600, 127
    %v602 = vand.u32 2147483647, %v485
    %v603 = vand.u32 %v602, 8388607
    %v604 = vor.u32 %v603, 8388608
    %v605 = vsub.s32 0, %v604
    %v606 = vadd.s32 %v601, 1
    %vm607 = vcmp.gt.s32.totalorder %v606, 0
    %v608 = vsel %vm607, %v606, 0
    %v609 = vshrl.u32 %v608, 5
    %v610 = vand.u32 %v608, 31
    %v611 = vsub.s32 32, %v610
    %v612 = vshrl.u32 683565275, %v611
    %v613 = vshll.u32 683565275, %v610
    %v614 = vshrl.u32 2475754826, %v611
    %v615 = vor.u32 %v613, %v614
    %v616 = vshll.u32 2475754826, %v610
    %v617 = vshrl.u32 2131351028, %v611
    %v618 = vor.u32 %v616, %v617
    %v619 = vshll.u32 2131351028, %v610
    %v620 = vshrl.u32 2102212464, %v611
    %v621 = vor.u32 %v619, %v620
    %v622 = vshll.u32 2102212464, %v610
    %v623 = vshrl.u32 920167782, %v611
    %v624 = vor.u32 %v622, %v623
    %v625 = vshll.u32 920167782, %v610
    %v626 = vshrl.u32 1326507024, %v611
    %v627 = vor.u32 %v625, %v626
    %vm628 = vcmp.lt.s32.totalorder %v609, 1
    %vm629 = vcmp.lt.s32.totalorder %v609, 2
    %vm630 = vcmp.lt.s32.totalorder %v609, 3
    %vm631 = vcmp.lt.s32.totalorder %v609, 4
    %v632 = vsel %vm628, %v612, %v615
    %v633 = vsel %vm631, %v621, 2102212464
    %v634 = vsel %vm630, %v618, %v633
    %v635 = vsel %vm629, %v632, %v634
    %v636 = vsel %vm628, %v615, %v618
    %v637 = vsel %vm631, %v624, 920167782
    %v638 = vsel %vm630, %v621, %v637
    %v639 = vsel %vm629, %v636, %v638
    %v640 = vsel %vm628, %v618, %v621
    %v641 = vsel %vm631, %v627, 1326507024
    %v642 = vsel %vm630, %v624, %v641
    %v643 = vsel %vm629, %v640, %v642
    %v644 = vshll.u32 %v604, 8
    %v645 = vmul.u32.u64.compose %v644, %v643
    %v646 = vextract.low.u32 %v645
    %v647 = vextract.high.u32 %v645
    %v648 = vmul.u32.u64.compose %v644, %v639
    %v649 = vextract.low.u32 %v648
    %v650 = vextract.high.u32 %v648
    %v651 = vmul.u32 %v644, %v635
    %v652 = vadd.s32 %v647, %v649
    %vm653 = vc.u32 %v647, %v649
    %v654 = vadd.s32 %v650, 1
    %v655 = vsel %vm653, %v654, %v650
    %v656 = vadd.s32 %v651, %v655
    %v657 = vadd.s32 %v656, 536870912
    %v658 = vshrl.u32 %v657, 30
    %v659 = vshll.u32 %v658, 30
    %v660 = vsub.s32 %v656, %v659
    %vm661 = vcmp.lt.s32.totalorder %v660, 0
    %v662 = vsub.s32 0, %v660
    %v663 = vsel %vm661, %v662, %v660
    %v664 = vclz %v663
    %v665 = vsub.s32 %v664, 2
    %vm666 = vcmp.gt.s32.totalorder 0, %v665
    %v667 = vsel %vm666, 0, %v665
    %v668 = vsub.s32 32, %v667
    %v669 = vshll.u32 %v660, %v667
    %v670 = vshrl.u32 %v652, %v668
    %v671 = vor.u32 %v669, %v670
    %v672 = vsub.s32 4294967266, %v667
    %v673 = vadd.s32 %v672, 127
    %v674 = vshll.u32 %v673, 23
    %v675 = vor.u32 4788187, %v674
    %v676 = vand.u32 2147483647, %v675
    %v678 = vcvt.s32.f32 %v671
    %v679 = vmul.f32 %v678, %v676
    %v680 = vxor.u32 %v679, 2147483648
    %v681 = vsel %vm598, %v680, %v679
    %v682 = vsub.s32 4, %v658
    %v683 = vsel %vm598, %v682, %v658
    %v684 = vsel %vm597, %v485, %v681
    %v685 = vsel %vm597, 0, %v683
    %v686 = vcosq.f32.pop %v684
    %v687 = vsinq.f32.pop %v684
    %vm688 = vweird.f32 %v485
    %v689 = vand.u32 %v685, 3
    %vm690 = vcmp.lt.s32.totalorder %v689, 2
    %vm691 = vcmp.eq.s32.totalorder %v689, 0
    %v692 = vxor.u32 %v687, 2147483648
    %v693 = vsel %vm691, %v686, %v692
    %vm694 = vcmp.eq.s32.totalorder %v689, 2
    %v695 = vxor.u32 %v686, 2147483648
    %v696 = vsel %vm694, %v695, %v687
    %v697 = vsel %vm690, %v693, %v696
    %v698 = vsel %vm688, nan, %v697
    %700 = vrot.lane.b32.xlu0 %v698, 80
    %v701 = vpop.permute.xlu0 %700
    %vm703 = vcmask 779904
    %704 = vst.msk [vmem:[#allocation5] sm:$0x3] %vm703, %v701
    %v705 = vld [vmem:[#allocation2] sm:$0x3]
    %707 = vset.pattern.permute.xlu0 3
    %708 = vperm.xlu0 %707, %v705
    %v709 = vpop.permute.xlu0 %708
    %v711 = vmul.f32 %v709, %v35
    %v712 = vand.u32 2147483647, %v711
    %vm713 = vcmp.le.f32.partialorder %v712, 0.7853982
    %vm714 = vcmp.lt.s32.totalorder %v711, 0
    %v715 = vand.u32 %v711, 2139095040
    %v716 = vshrl.u32 %v715, 23
    %v717 = vsub.s32 %v716, 127
    %v718 = vand.u32 2147483647, %v711
    %v719 = vand.u32 %v718, 8388607
    %v720 = vor.u32 %v719, 8388608
    %v721 = vsub.s32 0, %v720
    %v722 = vadd.s32 %v717, 1
    %vm723 = vcmp.gt.s32.totalorder %v722, 0
    %v724 = vsel %vm723, %v722, 0
    %v725 = vshrl.u32 %v724, 5
    %v726 = vand.u32 %v724, 31
    %v727 = vsub.s32 32, %v726
    %v728 = vshrl.u32 683565275, %v727
    %v729 = vshll.u32 683565275, %v726
    %v730 = vshrl.u32 2475754826, %v727
    %v731 = vor.u32 %v729, %v730
    %v732 = vshll.u32 2475754826, %v726
    %v733 = vshrl.u32 2131351028, %v727
    %v734 = vor.u32 %v732, %v733
    %v735 = vshll.u32 2131351028, %v726
    %v736 = vshrl.u32 2102212464, %v727
    %v737 = vor.u32 %v735, %v736
    %v738 = vshll.u32 2102212464, %v726
    %v739 = vshrl.u32 920167782, %v727
    %v740 = vor.u32 %v738, %v739
    %v741 = vshll.u32 920167782, %v726
    %v742 = vshrl.u32 1326507024, %v727
    %v743 = vor.u32 %v741, %v742
    %vm744 = vcmp.lt.s32.totalorder %v725, 1
    %vm745 = vcmp.lt.s32.totalorder %v725, 2
    %vm746 = vcmp.lt.s32.totalorder %v725, 3
    %vm747 = vcmp.lt.s32.totalorder %v725, 4
    %v748 = vsel %vm744, %v728, %v731
    %v749 = vsel %vm747, %v737, 2102212464
    %v750 = vsel %vm746, %v734, %v749
    %v751 = vsel %vm745, %v748, %v750
    %v752 = vsel %vm744, %v731, %v734
    %v753 = vsel %vm747, %v740, 920167782
    %v754 = vsel %vm746, %v737, %v753
    %v755 = vsel %vm745, %v752, %v754
    %v756 = vsel %vm744, %v734, %v737
    %v757 = vsel %vm747, %v743, 1326507024
    %v758 = vsel %vm746, %v740, %v757
    %v759 = vsel %vm745, %v756, %v758
    %v760 = vshll.u32 %v720, 8
    %v761 = vmul.u32.u64.compose %v760, %v759
    %v762 = vextract.low.u32 %v761
    %v763 = vextract.high.u32 %v761
    %v764 = vmul.u32.u64.compose %v760, %v755
    %v765 = vextract.low.u32 %v764
    %v766 = vextract.high.u32 %v764
    %v767 = vmul.u32 %v760, %v751
    %v768 = vadd.s32 %v763, %v765
    %vm769 = vc.u32 %v763, %v765
    %v770 = vadd.s32 %v766, 1
    %v771 = vsel %vm769, %v770, %v766
    %v772 = vadd.s32 %v767, %v771
    %v773 = vadd.s32 %v772, 536870912
    %v774 = vshrl.u32 %v773, 30
    %v775 = vshll.u32 %v774, 30
    %v776 = vsub.s32 %v772, %v775
    %vm777 = vcmp.lt.s32.totalorder %v776, 0
    %v778 = vsub.s32 0, %v776
    %v779 = vsel %vm777, %v778, %v776
    %v780 = vclz %v779
    %v781 = vsub.s32 %v780, 2
    %vm782 = vcmp.gt.s32.totalorder 0, %v781
    %v783 = vsel %vm782, 0, %v781
    %v784 = vsub.s32 32, %v783
    %v785 = vshll.u32 %v776, %v783
    %v786 = vshrl.u32 %v768, %v784
    %v787 = vor.u32 %v785, %v786
    %v788 = vsub.s32 4294967266, %v783
    %v789 = vadd.s32 %v788, 127
    %v790 = vshll.u32 %v789, 23
    %v791 = vor.u32 4788187, %v790
    %v792 = vand.u32 2147483647, %v791
    %v794 = vcvt.s32.f32 %v787
    %v795 = vmul.f32 %v794, %v792
    %v796 = vxor.u32 %v795, 2147483648
    %v797 = vsel %vm714, %v796, %v795
    %v798 = vsub.s32 4, %v774
    %v799 = vsel %vm714, %v798, %v774
    %v800 = vsel %vm713, %v711, %v797
    %v801 = vsel %vm713, 0, %v799
    %v802 = vcosq.f32.pop %v800
    %v803 = vsinq.f32.pop %v800
    %vm804 = vweird.f32 %v711
    %v805 = vadd.s32 %v801, 3
    %v806 = vand.u32 %v805, 3
    %vm807 = vcmp.lt.s32.totalorder %v806, 2
    %vm808 = vcmp.eq.s32.totalorder %v806, 0
    %v809 = vxor.u32 %v803, 2147483648
    %v810 = vsel %vm808, %v802, %v809
    %vm811 = vcmp.eq.s32.totalorder %v806, 2
    %v812 = vxor.u32 %v802, 2147483648
    %v813 = vsel %vm811, %v812, %v803
    %v814 = vsel %vm807, %v810, %v813
    %v815 = vsel %vm804, nan, %v814
    %817 = vrot.lane.b32.xlu0 %v815, 96
    %v818 = vpop.permute.xlu0 %817
    %vm820 = vcmask 911104
    %821 = vst.msk [vmem:[#allocation5] sm:$0x3] %vm820, %v818
    %v822 = vand.u32 2147483647, %v711
    %vm823 = vcmp.le.f32.partialorder %v822, 0.7853982
    %vm824 = vcmp.lt.s32.totalorder %v711, 0
    %v825 = vand.u32 %v711, 2139095040
    %v826 = vshrl.u32 %v825, 23
    %v827 = vsub.s32 %v826, 127
    %v828 = vand.u32 2147483647, %v711
    %v829 = vand.u32 %v828, 8388607
    %v830 = vor.u32 %v829, 8388608
    %v831 = vsub.s32 0, %v830
    %v832 = vadd.s32 %v827, 1
    %vm833 = vcmp.gt.s32.totalorder %v832, 0
    %v834 = vsel %vm833, %v832, 0
    %v835 = vshrl.u32 %v834, 5
    %v836 = vand.u32 %v834, 31
    %v837 = vsub.s32 32, %v836
    %v838 = vshrl.u32 683565275, %v837
    %v839 = vshll.u32 683565275, %v836
    %v840 = vshrl.u32 2475754826, %v837
    %v841 = vor.u32 %v839, %v840
    %v842 = vshll.u32 2475754826, %v836
    %v843 = vshrl.u32 2131351028, %v837
    %v844 = vor.u32 %v842, %v843
    %v845 = vshll.u32 2131351028, %v836
    %v846 = vshrl.u32 2102212464, %v837
    %v847 = vor.u32 %v845, %v846
    %v848 = vshll.u32 2102212464, %v836
    %v849 = vshrl.u32 920167782, %v837
    %v850 = vor.u32 %v848, %v849
    %v851 = vshll.u32 920167782, %v836
    %v852 = vshrl.u32 1326507024, %v837
    %v853 = vor.u32 %v851, %v852
    %vm854 = vcmp.lt.s32.totalorder %v835, 1
    %vm855 = vcmp.lt.s32.totalorder %v835, 2
    %vm856 = vcmp.lt.s32.totalorder %v835, 3
    %vm857 = vcmp.lt.s32.totalorder %v835, 4
    %v858 = vsel %vm854, %v838, %v841
    %v859 = vsel %vm857, %v847, 2102212464
    %v860 = vsel %vm856, %v844, %v859
    %v861 = vsel %vm855, %v858, %v860
    %v862 = vsel %vm854, %v841, %v844
    %v863 = vsel %vm857, %v850, 920167782
    %v864 = vsel %vm856, %v847, %v863
    %v865 = vsel %vm855, %v862, %v864
    %v866 = vsel %vm854, %v844, %v847
    %v867 = vsel %vm857, %v853, 1326507024
    %v868 = vsel %vm856, %v850, %v867
    %v869 = vsel %vm855, %v866, %v868
    %v870 = vshll.u32 %v830, 8
    %v871 = vmul.u32.u64.compose %v870, %v869
    %v872 = vextract.low.u32 %v871
    %v873 = vextract.high.u32 %v871
    %v874 = vmul.u32.u64.compose %v870, %v865
    %v875 = vextract.low.u32 %v874
    %v876 = vextract.high.u32 %v874
    %v877 = vmul.u32 %v870, %v861
    %v878 = vadd.s32 %v873, %v875
    %vm879 = vc.u32 %v873, %v875
    %v880 = vadd.s32 %v876, 1
    %v881 = vsel %vm879, %v880, %v876
    %v882 = vadd.s32 %v877, %v881
    %v883 = vadd.s32 %v882, 536870912
    %v884 = vshrl.u32 %v883, 30
    %v885 = vshll.u32 %v884, 30
    %v886 = vsub.s32 %v882, %v885
    %vm887 = vcmp.lt.s32.totalorder %v886, 0
    %v888 = vsub.s32 0, %v886
    %v889 = vsel %vm887, %v888, %v886
    %v890 = vclz %v889
    %v891 = vsub.s32 %v890, 2
    %vm892 = vcmp.gt.s32.totalorder 0, %v891
    %v893 = vsel %vm892, 0, %v891
    %v894 = vsub.s32 32, %v893
    %v895 = vshll.u32 %v886, %v893
    %v896 = vshrl.u32 %v878, %v894
    %v897 = vor.u32 %v895, %v896
    %v898 = vsub.s32 4294967266, %v893
    %v899 = vadd.s32 %v898, 127
    %v900 = vshll.u32 %v899, 23
    %v901 = vor.u32 4788187, %v900
    %v902 = vand.u32 2147483647, %v901
    %v904 = vcvt.s32.f32 %v897
    %v905 = vmul.f32 %v904, %v902
    %v906 = vxor.u32 %v905, 2147483648
    %v907 = vsel %vm824, %v906, %v905
    %v908 = vsub.s32 4, %v884
    %v909 = vsel %vm824, %v908, %v884
    %v910 = vsel %vm823, %v711, %v907
    %v911 = vsel %vm823, 0, %v909
    %v912 = vcosq.f32.pop %v910
    %v913 = vsinq.f32.pop %v910
    %vm914 = vweird.f32 %v711
    %v915 = vand.u32 %v911, 3
    %vm916 = vcmp.lt.s32.totalorder %v915, 2
    %vm917 = vcmp.eq.s32.totalorder %v915, 0
    %v918 = vxor.u32 %v913, 2147483648
    %v919 = vsel %vm917, %v912, %v918
    %vm920 = vcmp.eq.s32.totalorder %v915, 2
    %v921 = vxor.u32 %v912, 2147483648
    %v922 = vsel %vm920, %v921, %v913
    %v923 = vsel %vm916, %v919, %v922
    %v924 = vsel %vm914, nan, %v923
    %926 = vrot.lane.b32.xlu0 %v924, 112
    %v927 = vpop.permute.xlu0 %926
    %vm929 = vcmask 1042304
    %930 = vst.msk [vmem:[#allocation5] sm:$0x3] %vm929, %v927
    // Predicated region
    $region14: #{tpu_custom_call.1} parent=1 // pred_check
      _
    $region15: #{tpu_custom_call.1} parent=1 // pred_check_branch
      %932 = sbr.rel (0) target = $region17
    $region16: #{tpu_custom_call.1} parent=1 // pred_region
      %s934 = ssub.s32 32, 32
      %935 = vsyncadd [#allocation4], %s934
      %s937 = sshll.u32 [#allocation5], 4
      %s938 = int_to_ptr.vmem [resolvable:$true] %s937
      %940 = dma.vmem_to_hbm [thread:$0]  %s938, 32, %s2, [#allocation4]
    $region17: #{tpu_custom_call.1} parent=1 // pred_fallthru
      _
    // Predicated region
    $region18: #{tpu_custom_call.1} parent=1 // pred_check
      _
    $region19: #{tpu_custom_call.1} parent=1 // pred_check_branch
      %942 = sbr.rel (0) target = $region21
    $region20: #{tpu_custom_call.1} parent=1 // pred_region
      %943 = dma.done [#allocation4], 32
    $region21: #{tpu_custom_call.1} parent=1 // pred_fallthru
      _
    %944 = vsyncpa [#allocation3], 1
    %945 = vsyncpa [#allocation4], 1

</llo_original>
